<compile_context>
chip_gen: v7x
topology: tpu7x:2x2x1
jax: 0.10.0
libtpu: 0.0.40
codegen_flags: <defaults>
</compile_context>

<pallas_src>
import numpy as np
import jax
import jax.numpy as jnp
from jax import lax
from jax.experimental import pallas as pl
from jax.experimental.pallas import tpu as pltpu


# ---------------------------------------------------------------------------
# Host-side packing of conv weights into banded matrices
# ---------------------------------------------------------------------------
def _pack_conv_matrices(w_hwio, img_w, pool_size, pool_packed):
    """(K, K, Cin, Cout) HWIO -> (K, Cin*W, Cout*W) banded matrices.

    M[kh, ci*W + wi, col(co, wo)] = w[kh, wi - wo + K//2, ci, co], zero when the
    kw index falls outside the kernel (encodes the zero same-padding in W).
    col(co, wo) = co*W + wo for inner layers; for the last layer it is
    (wo % pool)*Cout*Wp + co*Wp + wo//pool so W-pool partners are Cout*Wp lanes
    apart.  The caller reshapes to (K*Cin*W, Cout*W) for the tap-folded matmul.
    """
    w = np.asarray(w_hwio, np.float32)
    K, K2, cin, cout = w.shape
    assert K == K2
    p = K // 2
    Wp = img_w // pool_size
    mats = np.zeros((K, cin * img_w, cout * img_w), np.float32)
    for kh in range(K):
        for kw in range(K):
            for wo in range(img_w):
                wi = wo + kw - p
                if not (0 <= wi < img_w):
                    continue
                if pool_packed:
                    start = (wo % pool_size) * cout * Wp + (wo // pool_size)
                    stop = ((wo % pool_size) + 1) * cout * Wp
                    step = Wp
                else:
                    start, stop, step = wo, cout * img_w, img_w
                mats[kh, wi::img_w, start:stop:step] = w[kh, kw]
    return mats


def _pack_bias(b, img_w, cout, pool_size, pool_packed):
    b = np.asarray(b, np.float32)
    if pool_packed:
        Wp = img_w // pool_size
        row = np.tile(np.repeat(b, Wp), pool_size)   # lane = q*Cout*Wp + c*Wp + wp
    else:
        row = np.repeat(b, img_w)                    # lane = c*W + w
    return row.reshape(1, cout * img_w)


# ---------------------------------------------------------------------------
# Kernel
# ---------------------------------------------------------------------------
def _make_encoder_kernel(depth, K, pool, H, W, cout, bt, pack):
    p = K // 2
    Hp, Wp = H // pool, W // pool
    Hpk = Hp // pack
    L = cout * W          # packed lane width of every conv-layer output
    CWp = cout * Wp       # lane width of one pooled row

    def kernel(*refs):
        x_ref = refs[0]                            # (bt, H+2p, Cin0*W) bf16 padded input
        out_ref = refs[1 + 2 * depth]              # (bt, Hp//pack, pack*CWp) f32
        pad_ref = refs[2 + 2 * depth]              # (bt, H+2p, L) bf16 padded activation

        # Re-zero the H-halo rows every grid step: gating on program_id == 0
        # would break under megacore (per-core scratch), and the cost is only
        # 2*p sublane rows per step.
        if depth > 1:
            zhalo = jnp.zeros((bt, p, L), jnp.bfloat16)
            pad_ref[:, 0:p, :] = zhalo
            pad_ref[:, p + H:2 * p + H, :] = zhalo

        src = x_ref
        y = None
        for l in range(depth):
            m_ref = refs[1 + 2 * l]                # (K*Lin, L) bf16 tap-folded weights
            b_ref = refs[2 + 2 * l]                # (1, L)     f32 packed bias
            lin = m_ref.shape[0] // K
            # Tap-folded LHS: K shifted row-windows concatenated along lanes
            # -> one lane-dense matmul per layer with contraction depth K*Lin.
            # TODO(synk): if the sublane-offset slices lower to relayout copies,
            # rebuild the shifted views with pltpu.roll along the sublane axis.
            lhs = jnp.concatenate([src[:, kh:kh + H, :] for kh in range(K)],
                                  axis=-1).reshape(bt * H, K * lin)
            acc = jnp.dot(lhs, m_ref[...], preferred_element_type=jnp.float32)
            acc = jnp.maximum(acc + b_ref[...], 0.0)          # bias + fused ReLU (f32)
            if l + 1 < depth:                                  # re-pad H for next layer
                pad_ref[:, p:p + H, :] = acc.reshape(bt, H, L).astype(jnp.bfloat16)
                src = pad_ref
            else:
                y = acc.reshape(bt, H, L)          # pool-permuted lanes

        # MaxPool along W: partners are contiguous CWp-lane blocks.
        mw = y[:, :, 0:CWp]
        for q in range(1, pool):
            mw = jnp.maximum(mw, y[:, :, q * CWp:(q + 1) * CWp])
        # MaxPool along H.
        mh = mw.reshape(bt, Hp, pool, CWp).max(axis=2)         # (bt, Hp, CWp)
        # Lane-dense output: `pack` contiguous groups of Hp//pack pooled rows
        # are placed side by side along lanes (>=128-lane unmasked stores).
        parts = [mh[:, j * Hpk:(j + 1) * Hpk, :] for j in range(pack)]
        packed = parts[0] if pack == 1 else jnp.concatenate(parts, axis=-1)
        out_ref[...] = packed.astype(out_ref.dtype)

    return kernel


# ---------------------------------------------------------------------------
# Wrapper
# ---------------------------------------------------------------------------
def encoder_forward(img_nchw, weights, biases, pool_size, batch_tile=None):
    """img_nchw: (B, Cin, H, W). weights[l]: (K, K, cin_l, Cout) HWIO. biases[l]: (Cout,)."""
    depth = len(weights)
    B, Cin, H, W = img_nchw.shape
    K = weights[0].shape[0]
    Cout = weights[-1].shape[-1]
    p = K // 2
    assert K % 2 == 1, "even kernel_size with padding=K//2 changes spatial size in PyTorch"
    assert H % pool_size == 0 and W % pool_size == 0
    Hp, Wp = H // pool_size, W // pool_size
    CWp = Cout * Wp

    # Batch tile: fill the MXU M dimension (target <=256 rows) but keep >=2
    # grid steps when possible (second TensorCore on v7x + DMA/compute overlap).
    if batch_tile is None:
        bt = min(B, max(1, 256 // H))
        if B // bt < 2 and B >= 2:
            bt = max(1, B // 2)
        while B % bt != 0:
            bt -= 1
    else:
        bt = batch_tile
    assert B % bt == 0
    grid = (B // bt,)

    # Lane-dense output packing factor.
    pack = 1
    if CWp < 128:
        pack = min(Hp, max(1, 128 // CWp))
        while pack > 1 and Hp % pack != 0:
            pack -= 1

    # Pack the image: NCHW -> (B, H, Cin*W) with lane = ci*W + w; zero-pad H once; bf16.
    x = jnp.transpose(img_nchw.astype(jnp.float32), (0, 2, 1, 3)).reshape(B, H, Cin * W)
    x = jnp.pad(x, ((0, 0), (p, p), (0, 0))).astype(jnp.bfloat16)

    in_specs = [pl.BlockSpec((bt, H + 2 * p, Cin * W), lambda i: (i, 0, 0))]
    args = [x]
    flops = 0
    for l in range(depth):
        cin_l = weights[l].shape[2]
        last = (l == depth - 1)
        m_np = _pack_conv_matrices(weights[l], W, pool_size, pool_packed=last)
        m_l = jnp.asarray(m_np.reshape(K * cin_l * W, Cout * W), jnp.bfloat16)
        b_l = jnp.asarray(_pack_bias(biases[l], W, Cout, pool_size, pool_packed=last))
        in_specs.append(pl.BlockSpec(m_l.shape, lambda i: (0, 0)))
        in_specs.append(pl.BlockSpec(b_l.shape, lambda i: (0, 0)))
        args += [m_l, b_l]
        flops += 2 * B * H * (K * cin_l * W) * (Cout * W)

    out_specs = pl.BlockSpec((bt, Hp // pack, pack * CWp), lambda i: (i, 0, 0))
    out_shape = jax.ShapeDtypeStruct((B, Hp // pack, pack * CWp), jnp.float32)
    bytes_accessed = (int(x.size) * 2
                      + sum(int(np.prod(a.shape)) * a.dtype.itemsize for a in args[1:])
                      + B * Hp * CWp * 4)

    out_packed = pl.pallas_call(
        _make_encoder_kernel(depth, K, pool_size, H, W, Cout, bt, pack),
        out_shape=out_shape,
        grid=grid,
        in_specs=in_specs,
        out_specs=out_specs,
        scratch_shapes=[pltpu.VMEM((bt, H + 2 * p, Cout * W), jnp.bfloat16)],
        compiler_params=pltpu.CompilerParams(dimension_semantics=("parallel",)),
        cost_estimate=pl.CostEstimate(flops=int(flops), transcendentals=0,
                                      bytes_accessed=int(bytes_accessed)),
    )(*args)

    # Unpack: (B, Hp//pack, pack*CWp) with lane = j*CWp + co*Wp + wp and pooled
    # H index = j*(Hp//pack) + r  ->  NCHW (B, Cout, Hp, Wp).
    out = out_packed.reshape(B, Hp // pack, pack, Cout, Wp)
    out = out.transpose(0, 3, 2, 1, 4).reshape(B, Cout, Hp, Wp)
    return out


# ---------------------------------------------------------------------------
# Pure-JAX references (PyTorch semantics); mirror_bf16 matches the kernel's
# quantization points exactly (bf16 operands, f32 accumulation / bias / ReLU,
# bf16 round of inter-layer activations, f32 max-pool).
# ---------------------------------------------------------------------------
def encoder_reference(img_nchw, weights, biases, pool_size, mirror_bf16):
    x = jnp.transpose(img_nchw, (0, 2, 3, 1)).astype(jnp.float32)
    for w, b in zip(weights, biases):
        K = w.shape[0]
        if mirror_bf16:
            xin = x.astype(jnp.bfloat16)
            wl = w.astype(jnp.bfloat16)
        else:
            xin, wl = x, w.astype(jnp.float32)
        x = lax.conv_general_dilated(
            xin, wl, window_strides=(1, 1),
            padding=[(K // 2, K // 2), (K // 2, K // 2)],
            dimension_numbers=('NHWC', 'HWIO', 'NHWC'),
            preferred_element_type=jnp.float32)
        x = jnp.maximum(x + b.reshape(1, 1, 1, -1).astype(jnp.float32), 0.0)
    x = lax.reduce_window(x, -jnp.inf, lax.max,
                          (1, pool_size, pool_size, 1),
                          (1, pool_size, pool_size, 1), 'VALID')
    return jnp.transpose(x, (0, 3, 1, 2))


if __name__ == "__main__":
    # Encoder(in_channels=4, out_channels=8, depth=2, kernel_size=3, pool_size=2)
    B, Cin, Cout, H, W = 2, 4, 8, 16, 16
    depth, K, pool = 2, 3, 2

    key = jax.random.PRNGKey(0)
    keys = jax.random.split(key, 2 * depth + 1)
    img = jax.random.normal(keys[0], (B, Cin, H, W), jnp.float32)

    # Deterministic PyTorch-like init: uniform(-1/sqrt(fan_in), 1/sqrt(fan_in))
    weights, biases = [], []
    cin = Cin
    for l in range(depth):
        fan_in = cin * K * K
        bound = 1.0 / (fan_in ** 0.5)
        w = jax.random.uniform(keys[1 + 2 * l], (K, K, cin, Cout),
                               jnp.float32, -bound, bound)
        bvec = jax.random.uniform(keys[2 + 2 * l], (Cout,),
                                  jnp.float32, -bound, bound)
        weights.append(w)
        biases.append(bvec)
        cin = Cout

    out = jax.block_until_ready(encoder_forward(img, weights, biases, pool))
    assert out.shape == (B, Cout, H // pool, W // pool), out.shape

    ref_bf16 = encoder_reference(img, weights, biases, pool, mirror_bf16=True)
    ref_f32 = encoder_reference(img, weights, biases, pool, mirror_bf16=False)
    # Tight check vs bf16-mirrored reference (same quantization points, different
    # compute path), loose semantic check vs the full-f32 reference.
    err_bf16 = float(jnp.abs(out - ref_bf16).max())
    err_f32 = float(jnp.abs(out - ref_f32).max())
    assert jnp.allclose(out, ref_bf16, atol=2e-3, rtol=2e-3), err_bf16
    assert jnp.allclose(out, ref_f32, atol=1e-1, rtol=1e-1), err_f32
    print("KERNEL_OK")
</pallas_src>

<mosaic_0001>
module attributes {stable_mosaic.version = 11 : i64} {
  func.func @kernel(%arg0: i32, %arg1: memref<1x18x64xbf16, #tpu.memory_space<vmem>>, %arg2: memref<192x128xbf16, #tpu.memory_space<vmem>>, %arg3: memref<1x128xf32, #tpu.memory_space<vmem>>, %arg4: memref<384x128xbf16, #tpu.memory_space<vmem>>, %arg5: memref<1x128xf32, #tpu.memory_space<vmem>>, %arg6: memref<1x4x128xf32, #tpu.memory_space<vmem>>, %arg7: memref<1x18x128xbf16, #tpu.memory_space<vmem>>) attributes {dimension_semantics = [#tpu.dimension_semantics<parallel>], iteration_bounds = array<i64: 2>, scalar_prefetch = 0 : i64, scratch_operands = 1 : i64, tpu.core_type = #tpu.core_type<tc>, window_params = [{transform_indices = @transform_0, window_bounds = array<i64: 1, 18, 64>}, {pipeline_mode = #tpu.pipeline_mode<synchronous>, transform_indices = @transform_1, window_bounds = array<i64: 192, 128>}, {pipeline_mode = #tpu.pipeline_mode<synchronous>, transform_indices = @transform_2, window_bounds = array<i64: 1, 128>}, {pipeline_mode = #tpu.pipeline_mode<synchronous>, transform_indices = @transform_3, window_bounds = array<i64: 384, 128>}, {pipeline_mode = #tpu.pipeline_mode<synchronous>, transform_indices = @transform_4, window_bounds = array<i64: 1, 128>}, {transform_indices = @transform_5, window_bounds = array<i64: 1, 4, 128>}]} {
    %cst = arith.constant 0.000000e+00 : bf16
    %0 = vector.broadcast %cst : bf16 to vector<1x1x128xbf16>
    %c0 = arith.constant 0 : index
    %c0_0 = arith.constant 0 : index
    %c0_1 = arith.constant 0 : index
    %1 = vector.load %arg7[%c0, %c0_0, %c0_1] : memref<1x18x128xbf16, #tpu.memory_space<vmem>>, vector<1x1x128xbf16>
    tpu.vector_store %arg7[%c0, %c0_0, %c0_1], %0 {strides = array<i32>} : memref<1x18x128xbf16, #tpu.memory_space<vmem>>, vector<1x1x128xbf16>,
    %c0_2 = arith.constant 0 : index
    %c17 = arith.constant 17 : index
    %c0_3 = arith.constant 0 : index
    %2 = vector.load %arg7[%c0_2, %c17, %c0_3] : memref<1x18x128xbf16, #tpu.memory_space<vmem>>, vector<1x1x128xbf16>
    tpu.vector_store %arg7[%c0_2, %c17, %c0_3], %0 {strides = array<i32>} : memref<1x18x128xbf16, #tpu.memory_space<vmem>>, vector<1x1x128xbf16>,
    %c0_4 = arith.constant 0 : index
    %c0_5 = arith.constant 0 : index
    %c0_6 = arith.constant 0 : index
    %3 = vector.load %arg1[%c0_4, %c0_5, %c0_6] : memref<1x18x64xbf16, #tpu.memory_space<vmem>>, vector<1x16x64xbf16>
    %c0_7 = arith.constant 0 : index
    %c1 = arith.constant 1 : index
    %c0_8 = arith.constant 0 : index
    %4 = vector.load %arg1[%c0_7, %c1, %c0_8] : memref<1x18x64xbf16, #tpu.memory_space<vmem>>, vector<1x16x64xbf16>
    %c0_9 = arith.constant 0 : index
    %c2 = arith.constant 2 : index
    %c0_10 = arith.constant 0 : index
    %5 = vector.load %arg1[%c0_9, %c2, %c0_10] : memref<1x18x64xbf16, #tpu.memory_space<vmem>>, vector<1x16x64xbf16>
    %6 = tpu.concatenate %3, %4, %5 in 2 : vector<1x16x64xbf16>, vector<1x16x64xbf16>, vector<1x16x64xbf16> -> vector<1x16x192xbf16>
    %7 = vector.shape_cast %6 : vector<1x16x192xbf16> to vector<16x192xbf16>
    %c0_11 = arith.constant 0 : index
    %c0_12 = arith.constant 0 : index
    %8 = vector.load %arg2[%c0_11, %c0_12] : memref<192x128xbf16, #tpu.memory_space<vmem>>, vector<192x128xbf16>
    %cst_13 = arith.constant dense<0.000000e+00> : vector<16x128xf32>
    %9 = tpu.matmul %7, %8, %cst_13 {dimension_numbers = #tpu.dot_dimension_numbers<[1], [0], [0], [1], [0, 0, 1, 1], [], []>} : vector<16x192xbf16>, vector<192x128xbf16>, vector<16x128xf32> -> vector<16x128xf32>
    %c0_14 = arith.constant 0 : index
    %c0_15 = arith.constant 0 : index
    %10 = vector.load %arg3[%c0_14, %c0_15] : memref<1x128xf32, #tpu.memory_space<vmem>>, vector<1x128xf32>
    %11 = vector.broadcast %10 : vector<1x128xf32> to vector<16x128xf32>
    %12 = arith.addf %9, %11 : vector<16x128xf32>
    %cst_16 = arith.constant 0.000000e+00 : f32
    %13 = vector.broadcast %cst_16 : f32 to vector<16x128xf32>
    %14 = arith.maximumf %12, %13 : vector<16x128xf32>
    %15 = vector.shape_cast %14 : vector<16x128xf32> to vector<1x16x128xf32>
    %16 = arith.truncf %15 : vector<1x16x128xf32> to vector<1x16x128xbf16>
    %c0_17 = arith.constant 0 : index
    %c1_18 = arith.constant 1 : index
    %c0_19 = arith.constant 0 : index
    %17 = vector.load %arg7[%c0_17, %c1_18, %c0_19] : memref<1x18x128xbf16, #tpu.memory_space<vmem>>, vector<1x16x128xbf16>
    tpu.vector_store %arg7[%c0_17, %c1_18, %c0_19], %16 {strides = array<i32>} : memref<1x18x128xbf16, #tpu.memory_space<vmem>>, vector<1x16x128xbf16>,
    %c0_20 = arith.constant 0 : index
    %c0_21 = arith.constant 0 : index
    %c0_22 = arith.constant 0 : index
    %18 = vector.load %arg7[%c0_20, %c0_21, %c0_22] : memref<1x18x128xbf16, #tpu.memory_space<vmem>>, vector<1x16x128xbf16>
    %c0_23 = arith.constant 0 : index
    %c1_24 = arith.constant 1 : index
    %c0_25 = arith.constant 0 : index
    %19 = vector.load %arg7[%c0_23, %c1_24, %c0_25] : memref<1x18x128xbf16, #tpu.memory_space<vmem>>, vector<1x16x128xbf16>
    %c0_26 = arith.constant 0 : index
    %c2_27 = arith.constant 2 : index
    %c0_28 = arith.constant 0 : index
    %20 = vector.load %arg7[%c0_26, %c2_27, %c0_28] : memref<1x18x128xbf16, #tpu.memory_space<vmem>>, vector<1x16x128xbf16>
    %21 = tpu.concatenate %18, %19, %20 in 2 : vector<1x16x128xbf16>, vector<1x16x128xbf16>, vector<1x16x128xbf16> -> vector<1x16x384xbf16>
    %22 = vector.shape_cast %21 : vector<1x16x384xbf16> to vector<16x384xbf16>
    %c0_29 = arith.constant 0 : index
    %c0_30 = arith.constant 0 : index
    %23 = vector.load %arg4[%c0_29, %c0_30] : memref<384x128xbf16, #tpu.memory_space<vmem>>, vector<384x128xbf16>
    %cst_31 = arith.constant dense<0.000000e+00> : vector<16x128xf32>
    %24 = tpu.matmul %22, %23, %cst_31 {dimension_numbers = #tpu.dot_dimension_numbers<[1], [0], [0], [1], [0, 0, 1, 1], [], []>} : vector<16x384xbf16>, vector<384x128xbf16>, vector<16x128xf32> -> vector<16x128xf32>
    %c0_32 = arith.constant 0 : index
    %c0_33 = arith.constant 0 : index
    %25 = vector.load %arg5[%c0_32, %c0_33] : memref<1x128xf32, #tpu.memory_space<vmem>>, vector<1x128xf32>
    %26 = vector.broadcast %25 : vector<1x128xf32> to vector<16x128xf32>
    %27 = arith.addf %24, %26 : vector<16x128xf32>
    %cst_34 = arith.constant 0.000000e+00 : f32
    %28 = vector.broadcast %cst_34 : f32 to vector<16x128xf32>
    %29 = arith.maximumf %27, %28 : vector<16x128xf32>
    %30 = vector.shape_cast %29 : vector<16x128xf32> to vector<1x16x128xf32>
    %31 = vector.extract_strided_slice %30 {offsets = [0, 0, 0], sizes = [1, 16, 64], strides = [1, 1, 1]} : vector<1x16x128xf32> to vector<1x16x64xf32>
    %32 = vector.extract_strided_slice %30 {offsets = [0, 0, 64], sizes = [1, 16, 64], strides = [1, 1, 1]} : vector<1x16x128xf32> to vector<1x16x64xf32>
    %33 = arith.maximumf %31, %32 : vector<1x16x64xf32>
    %34 = vector.shape_cast %33 : vector<1x16x64xf32> to vector<1x8x2x64xf32>
    %cst_35 = arith.constant dense<0xFF800000> : vector<1x8x64xf32>
    %35 = vector.multi_reduction <maximumf>, %34, %cst_35 [2] : vector<1x8x2x64xf32> to vector<1x8x64xf32>
    %36 = vector.extract_strided_slice %35 {offsets = [0, 0, 0], sizes = [1, 4, 64], strides = [1, 1, 1]} : vector<1x8x64xf32> to vector<1x4x64xf32>
    %37 = vector.extract_strided_slice %35 {offsets = [0, 4, 0], sizes = [1, 4, 64], strides = [1, 1, 1]} : vector<1x8x64xf32> to vector<1x4x64xf32>
    %38 = tpu.concatenate %36, %37 in 2 : vector<1x4x64xf32>, vector<1x4x64xf32> -> vector<1x4x128xf32>
    %c0_36 = arith.constant 0 : index
    %c0_37 = arith.constant 0 : index
    %c0_38 = arith.constant 0 : index
    %39 = vector.load %arg6[%c0_36, %c0_37, %c0_38] : memref<1x4x128xf32, #tpu.memory_space<vmem>>, vector<1x4x128xf32>
    tpu.vector_store %arg6[%c0_36, %c0_37, %c0_38], %38 {strides = array<i32>} : memref<1x4x128xf32, #tpu.memory_space<vmem>>, vector<1x4x128xf32>,
    return
  }
  func.func @transform_0(%arg0: i32) -> (i32, i32, i32) {
    %c0_i32 = arith.constant 0 : i32
    %c0_i32_0 = arith.constant 0 : i32
    %c0_i32_1 = arith.constant 0 : i32
    return %arg0, %c0_i32, %c0_i32_0 : i32, i32, i32
  }
  func.func @transform_1(%arg0: i32) -> (i32, i32) {
    %c0_i32 = arith.constant 0 : i32
    %c0_i32_0 = arith.constant 0 : i32
    %c0_i32_1 = arith.constant 0 : i32
    return %c0_i32, %c0_i32_0 : i32, i32
  }
  func.func @transform_2(%arg0: i32) -> (i32, i32) {
    %c0_i32 = arith.constant 0 : i32
    %c0_i32_0 = arith.constant 0 : i32
    %c0_i32_1 = arith.constant 0 : i32
    return %c0_i32, %c0_i32_0 : i32, i32
  }
  func.func @transform_3(%arg0: i32) -> (i32, i32) {
    %c0_i32 = arith.constant 0 : i32
    %c0_i32_0 = arith.constant 0 : i32
    %c0_i32_1 = arith.constant 0 : i32
    return %c0_i32, %c0_i32_0 : i32, i32
  }
  func.func @transform_4(%arg0: i32) -> (i32, i32) {
    %c0_i32 = arith.constant 0 : i32
    %c0_i32_0 = arith.constant 0 : i32
    %c0_i32_1 = arith.constant 0 : i32
    return %c0_i32, %c0_i32_0 : i32, i32
  }
  func.func @transform_5(%arg0: i32) -> (i32, i32, i32) {
    %c0_i32 = arith.constant 0 : i32
    %c0_i32_0 = arith.constant 0 : i32
    %c0_i32_1 = arith.constant 0 : i32
    return %arg0, %c0_i32, %c0_i32_0 : i32, i32, i32
  }
}

</mosaic_0001>

<llo_original>
// kernel: tpu_custom_call.1
$region0: #{tpu_custom_call.1}
  #allocation0 [shape = 'u32[]', space=smem, size = 0x4, offset = 0x4, fixed_abs, tag = 'smem constant byte address 0x4 - core index']
  #allocation1 [shape = 'u32[144,128]{1,0:T(1,128)}', space=vmem, size = 0x12000, scoped, tag = 'internal scratch']
  #allocation2 [shape = 'bf16[1,18,128]{2,1,0:T(8,128)(2,1)}', space=vmem, size = 0x1800, scoped, tag = 'scratch operand']
  %s0 = inlined_call_operand.vmem [shape: bf16[2,18,64], index: 0, kind: input, shape index: {}]
  %s1 = inlined_call_operand.hbm [shape: bf16[192,128], index: 1, kind: input, shape index: {}]
  %s2 = inlined_call_operand.vmem [shape: f32[1,128], index: 2, kind: input, shape index: {}]
  %s3 = inlined_call_operand.hbm [shape: bf16[384,128], index: 3, kind: input, shape index: {}]
  %s4 = inlined_call_operand.vmem [shape: f32[1,128], index: 4, kind: input, shape index: {}]
  %s5 = inlined_call_operand.hbm [shape: f32[2,4,128], index: 5, kind: output, shape index: {}]
  %s6 = sld [smem:[#allocation0]]
  $region61: #{tpu_custom_call.1} parent=0
    _
  %s8 = ssub.s32 1, %s6
  %s9 = scalar_select 0, %s8, %s6
  $region1: #{tpu_custom_call.1} parent=0
    #allocation3 [shape = 'u8[49152]{0}', space=vmem, size = 0xc000, scoped, tag = 'input window, operand 1, single buffered']
    #allocation4 [shape = 's32[2]{0}', space=sflag, size = 0x8, scoped, tag = 'scoped memory for tpu_custom_call.1']
    #allocation5 [shape = 's32[2]{0}', space=sflag, size = 0x8, scoped, tag = 'scoped memory for tpu_custom_call.1']
    #allocation6 [shape = 'u8[98304]{0}', space=vmem, size = 0x18000, scoped, tag = 'input window, operand 3, single buffered']
    #allocation7 [shape = 's32[1]{0}', space=sflag, size = 0x4, scoped, tag = 'scoped memory for tpu_custom_call.1']
    #allocation8 [shape = 'u8[4096]{0}', space=vmem, size = 0x1000, scoped, tag = 'output window, operand 0']
    %10 = vsyncpa [#allocation4], 0
    %11 = vsyncpa [#allocation7], 0
    %12 = vsyncpa [#allocation5], 0
    %s13 = scalar_lea.sflag [#allocation5], 1
    %14 = vsyncpa %s13, 0
    loop: start=0, step=1, limit=4
    $region2: #{tpu_custom_call.1} parent=1 // loop_pre_header
      _
    $region3: #{tpu_custom_call.1} parent=1 // loop_header
      %s16 = sphi 0, %s20
      %p17 = scmp.ge.s32.totalorder %s16, 4
      %s26 = sphi 0, %s28
      %s29 = sphi 0, %s26
      %s30 = sphi 0, %s29
      %s46 = sphi 0, %s30
      %s50 = sphi 0, %s50
      %s52 = sphi 0, %s50
      %s53 = sphi 0, %s52
      %s67 = sphi 0, %s53
      %s71 = sphi 0, %s71
      %s73 = sphi 0, %s71
      %s74 = sphi 0, %s73
      %s88 = sphi 0, %s74
      %s92 = sphi 0, %s92
      %s94 = sphi 0, %s92
      %s95 = sphi 0, %s94
      %s109 = sphi 0, %s95
      %s113 = sphi 0, %s113
      %s115 = sphi 0, %s113
      %s116 = sphi 0, %s115
      %s130 = sphi 0, %s116
      %s136 = sphi 0, %s138
      %s139 = sphi 0, %s136
      %s140 = sphi 0, %s139
      %s156 = sphi 0, %s140
    $region4: #{tpu_custom_call.1} parent=1 // loop_header_branch
      %19 = sbr.rel (%p17) target = $region8
    $region5: #{tpu_custom_call.1} parent=1 // loop_body
      %s21 = ssub.s32 %s16, 1
      %s22 = ssub.s32 %s16, 2
      %s23 = sadd.s32 %s16, 1
      %s24 = ssub.s32 %s16, %s23
      %p25 = scmp.eq.s32.totalorder %s24, 0
      %s27 = sadd.s32 %s26, 1
      %s28 = scalar_select %p25, %s26, %s27
      %p31 = pneg %p25
      %p32 = scmp.eq.s32.totalorder %s16, 1
      %p33 = por %p31, %p32
      %p34 = scmp.ne.s32.totalorder %s26, %s29
      %p35 = scmp.eq.s32.totalorder %s16, 0
      %p36 = por %p34, %p35
      %p37 = scmp.ne.s32.totalorder %s26, %s29
      %p38 = scmp.eq.s32.totalorder %s21, 1
      %p39 = por %p37, %p38
      %p40 = scmp.ne.s32.totalorder %s29, %s30
      %p41 = scmp.eq.s32.totalorder %s21, 0
      %p42 = por %p40, %p41
      %p43 = scmp.ne.s32.totalorder %s29, %s30
      %p44 = scmp.eq.s32.totalorder %s22, 1
      %p45 = por %p43, %p44
      %p47 = scmp.ne.s32.totalorder %s30, %s46
      %p48 = scmp.eq.s32.totalorder %s22, 0
      %p49 = por %p47, %p48
      %s51 = sadd.s32 %s50, 1
      %p54 = scmp.eq.s32.totalorder %s16, 1
      %p55 = scmp.ne.s32.totalorder %s50, %s52
      %p56 = scmp.eq.s32.totalorder %s16, 0
      %p57 = por %p55, %p56
      %p58 = scmp.ne.s32.totalorder %s50, %s52
      %p59 = scmp.eq.s32.totalorder %s21, 1
      %p60 = por %p58, %p59
      %p61 = scmp.ne.s32.totalorder %s52, %s53
      %p62 = scmp.eq.s32.totalorder %s21, 0
      %p63 = por %p61, %p62
      %p64 = scmp.ne.s32.totalorder %s52, %s53
      %p65 = scmp.eq.s32.totalorder %s22, 1
      %p66 = por %p64, %p65
      %p68 = scmp.ne.s32.totalorder %s53, %s67
      %p69 = scmp.eq.s32.totalorder %s22, 0
      %p70 = por %p68, %p69
      %s72 = sadd.s32 %s71, 1
      %p75 = scmp.eq.s32.totalorder %s16, 1
      %p76 = scmp.ne.s32.totalorder %s71, %s73
      %p77 = scmp.eq.s32.totalorder %s16, 0
      %p78 = por %p76, %p77
      %p79 = scmp.ne.s32.totalorder %s71, %s73
      %p80 = scmp.eq.s32.totalorder %s21, 1
      %p81 = por %p79, %p80
      %p82 = scmp.ne.s32.totalorder %s73, %s74
      %p83 = scmp.eq.s32.totalorder %s21, 0
      %p84 = por %p82, %p83
      %p85 = scmp.ne.s32.totalorder %s73, %s74
      %p86 = scmp.eq.s32.totalorder %s22, 1
      %p87 = por %p85, %p86
      %p89 = scmp.ne.s32.totalorder %s74, %s88
      %p90 = scmp.eq.s32.totalorder %s22, 0
      %p91 = por %p89, %p90
      %s93 = sadd.s32 %s92, 1
      %p96 = scmp.eq.s32.totalorder %s16, 1
      %p97 = scmp.ne.s32.totalorder %s92, %s94
      %p98 = scmp.eq.s32.totalorder %s16, 0
      %p99 = por %p97, %p98
      %p100 = scmp.ne.s32.totalorder %s92, %s94
      %p101 = scmp.eq.s32.totalorder %s21, 1
      %p102 = por %p100, %p101
      %p103 = scmp.ne.s32.totalorder %s94, %s95
      %p104 = scmp.eq.s32.totalorder %s21, 0
      %p105 = por %p103, %p104
      %p106 = scmp.ne.s32.totalorder %s94, %s95
      %p107 = scmp.eq.s32.totalorder %s22, 1
      %p108 = por %p106, %p107
      %p110 = scmp.ne.s32.totalorder %s95, %s109
      %p111 = scmp.eq.s32.totalorder %s22, 0
      %p112 = por %p110, %p111
      %s114 = sadd.s32 %s113, 1
      %p117 = scmp.eq.s32.totalorder %s16, 1
      %p118 = scmp.ne.s32.totalorder %s113, %s115
      %p119 = scmp.eq.s32.totalorder %s16, 0
      %p120 = por %p118, %p119
      %p121 = scmp.ne.s32.totalorder %s113, %s115
      %p122 = scmp.eq.s32.totalorder %s21, 1
      %p123 = por %p121, %p122
      %p124 = scmp.ne.s32.totalorder %s115, %s116
      %p125 = scmp.eq.s32.totalorder %s21, 0
      %p126 = por %p124, %p125
      %p127 = scmp.ne.s32.totalorder %s115, %s116
      %p128 = scmp.eq.s32.totalorder %s22, 1
      %p129 = por %p127, %p128
      %p131 = scmp.ne.s32.totalorder %s116, %s130
      %p132 = scmp.eq.s32.totalorder %s22, 0
      %p133 = por %p131, %p132
      %s134 = ssub.s32 %s16, %s23
      %p135 = scmp.eq.s32.totalorder %s134, 0
      %s137 = sadd.s32 %s136, 1
      %s138 = scalar_select %p135, %s136, %s137
      %p141 = pneg %p135
      %p142 = scmp.eq.s32.totalorder %s16, 1
      %p143 = por %p141, %p142
      %p144 = scmp.ne.s32.totalorder %s136, %s139
      %p145 = scmp.eq.s32.totalorder %s16, 0
      %p146 = por %p144, %p145
      %p147 = scmp.ne.s32.totalorder %s136, %s139
      %p148 = scmp.eq.s32.totalorder %s21, 1
      %p149 = por %p147, %p148
      %p150 = scmp.ne.s32.totalorder %s139, %s140
      %p151 = scmp.eq.s32.totalorder %s21, 0
      %p152 = por %p150, %p151
      %p153 = scmp.ne.s32.totalorder %s139, %s140
      %p154 = scmp.eq.s32.totalorder %s22, 1
      %p155 = por %p153, %p154
      %p157 = scmp.ne.s32.totalorder %s140, %s156
      %p158 = scmp.eq.s32.totalorder %s22, 0
      %p159 = por %p157, %p158
      %p160 = scmp.le.s32.totalorder 1, %s16
      %p161 = scmp.lt.s32.totalorder %s16, 3
      %p162 = pnand %p160, %p161
      %p163 = pneg %p162
      // Predicated region
      $region9: #{tpu_custom_call.1} parent=5 // pred_check
        _
      $region10: #{tpu_custom_call.1} parent=5 // pred_check_branch
        %165 = sbr.rel (%p162) target = $region12
      $region11: #{tpu_custom_call.1} parent=5 // pred_region
        %s166 = ssub.s32 %s16, 1
        // Predicated region
        $region13: #{tpu_custom_call.1} parent=11 // pred_check
          %p167 = pneg %p63
        $region14: #{tpu_custom_call.1} parent=11 // pred_check_branch
          %169 = sbr.rel (%p167) target = $region16
        $region15: #{tpu_custom_call.1} parent=11 // pred_region
          %s171 = ssub.s32 1536, 1536
          %172 = vsyncadd [#allocation4], %s171
          %s173 = sshll.u32 [#allocation3], 4
          %s174 = int_to_ptr.vmem [resolvable:$true] %s173
          %179 = dma.hbm_to_vmem [thread:$0]  %s1, 1536, %s174, [#allocation4], 64, 64, 4
        $region16: #{tpu_custom_call.1} parent=11 // pred_fallthru
          _
        // Predicated region
        $region17: #{tpu_custom_call.1} parent=11 // pred_check
          %p180 = pneg %p84
        $region18: #{tpu_custom_call.1} parent=11 // pred_check_branch
          %182 = sbr.rel (%p180) target = $region20
        $region19: #{tpu_custom_call.1} parent=11 // pred_region
          _
        $region20: #{tpu_custom_call.1} parent=11 // pred_fallthru
          _
        // Predicated region
        $region21: #{tpu_custom_call.1} parent=11 // pred_check
          %p183 = pneg %p105
        $region22: #{tpu_custom_call.1} parent=11 // pred_check_branch
          %185 = sbr.rel (%p183) target = $region24
        $region23: #{tpu_custom_call.1} parent=11 // pred_region
          %s187 = ssub.s32 3072, 3072
          %188 = vsyncadd [#allocation7], %s187
          %s189 = sshll.u32 [#allocation6], 4
          %s190 = int_to_ptr.vmem [resolvable:$true] %s189
          %195 = dma.hbm_to_vmem [thread:$0]  %s3, 3072, %s190, [#allocation7], 64, 64, 4
        $region24: #{tpu_custom_call.1} parent=11 // pred_fallthru
          _
        // Predicated region
        $region25: #{tpu_custom_call.1} parent=11 // pred_check
          %p196 = pneg %p126
        $region26: #{tpu_custom_call.1} parent=11 // pred_check_branch
          %198 = sbr.rel (%p196) target = $region28
        $region27: #{tpu_custom_call.1} parent=11 // pred_region
          _
        $region28: #{tpu_custom_call.1} parent=11 // pred_fallthru
          _
      $region12: #{tpu_custom_call.1} parent=5 // pred_fallthru
        _
      %p199 = scmp.lt.s32.totalorder %s16, 2
      // Predicated region
      $region29: #{tpu_custom_call.1} parent=5 // pred_check
        %p200 = pneg %p199
      $region30: #{tpu_custom_call.1} parent=5 // pred_check_branch
        %202 = sbr.rel (%p200) target = $region32
      $region31: #{tpu_custom_call.1} parent=5 // pred_region
        // Predicated region
        $region33: #{tpu_custom_call.1} parent=31 // pred_check
          %p203 = pneg %p36
        $region34: #{tpu_custom_call.1} parent=31 // pred_check_branch
          %205 = sbr.rel (%p203) target = $region36
        $region35: #{tpu_custom_call.1} parent=31 // pred_region
          %p206 = scmp.lt.s32.totalorder %s16, 1
          %s207 = scalar_select %p206, %s16, 1
          %s208 = smul.addr %s207, 3
          %s209 = smul.addr %s208, 4
          %s210 = scalar_lea.vmem %s0, %s209
        $region36: #{tpu_custom_call.1} parent=31 // pred_fallthru
          _
      $region32: #{tpu_custom_call.1} parent=5 // pred_fallthru
        _
      %p211 = scmp.le.s32.totalorder 1, %s16
      %p212 = scmp.lt.s32.totalorder %s16, 3
      %p213 = pnand %p211, %p212
      %p214 = pneg %p213
      // Predicated region
      $region37: #{tpu_custom_call.1} parent=5 // pred_check
        _
      $region38: #{tpu_custom_call.1} parent=5 // pred_check_branch
        %216 = sbr.rel (%p213) target = $region40
      $region39: #{tpu_custom_call.1} parent=5 // pred_region
        %s217 = ssub.s32 %s16, 1
        // Predicated region
        $region41: #{tpu_custom_call.1} parent=39 // pred_check
          %p218 = pneg %p63
        $region42: #{tpu_custom_call.1} parent=39 // pred_check_branch
          %220 = sbr.rel (%p218) target = $region44
        $region43: #{tpu_custom_call.1} parent=39 // pred_region
          %221 = dma.done [#allocation4], 1536
        $region44: #{tpu_custom_call.1} parent=39 // pred_fallthru
          _
        // Predicated region
        $region45: #{tpu_custom_call.1} parent=39 // pred_check
          %p222 = pneg %p105
        $region46: #{tpu_custom_call.1} parent=39 // pred_check_branch
          %224 = sbr.rel (%p222) target = $region48
        $region47: #{tpu_custom_call.1} parent=39 // pred_region
          %225 = dma.done [#allocation7], 3072
        $region48: #{tpu_custom_call.1} parent=39 // pred_fallthru
          _
        %p226 = scmp.lt.s32.totalorder %s21, 1
        %s227 = scalar_select %p226, %s21, 1
        %s228 = smul.addr %s227, 3
        %s229 = smul.addr %s228, 4
        %s230 = scalar_lea.vmem %s0, %s229
        %p231 = pneg %p42
        %p232 = pneg %p39
        %p233 = pneg %p63
        %p234 = pneg %p60
        %p235 = pneg %p84
        %p236 = pneg %p81
        %p237 = pneg %p105
        %p238 = pneg %p102
        %p239 = pneg %p126
        %p240 = pneg %p123
        %p241 = pneg %p152
        %p242 = pneg %p149
        %s243 = sand.u32 %s139, 1
        %s244 = scalar_lea.sflag [#allocation5], %s243
        %s245 = sand.u32 %s139, 1
        %s246 = smul.addr %s245, 4
        %s247 = scalar_lea.vmem [#allocation8], %s246
        %p248 = scmp.lt.s32.totalorder %s21, 1
        %s249 = scalar_select %p248, %s21, 1
        %s250 = smul.addr %s249, 3
        %s251 = smul.addr %s250, 4
        %s252 = scalar_lea.vmem %s0, %s251
        %vm254 = vcmask 1040384
        %vm255 = vsmask.f32 256
        %vm256 = vmand %vm254, %vm255
        %v257 = vld [vmem:[#allocation2] sm:$0x1]
        %v258 = vsel %vm256, 0, %v257
        %259 = vst [vmem:[#allocation2] sm:$0x1] %v258
        %vm260 = vsmask.f32 7938
        %vm261 = vmand %vm254, %vm260
        %v262 = vld [vmem:[#allocation2 + $0x8] sm:$0x1]
        %v263 = vsel %vm261, 0, %v262
        %264 = vst [vmem:[#allocation2 + $0x8] sm:$0x1] %v263
        %v265 = vld [vmem:[%s252] sm:$0xf]
        %v266 = vld [vmem:[%s252 + $0x4] sm:$0xf]
        %v267 = vld [vmem:[%s252 + $0x8] sm:$0x1]
        %v268 = vld [vmem:[%s252] sm:$0xe]
        %v271 = vunpack.c.l.b16 %v265
        %v272 = vunpack.c.l.b16 %v266
        %v273 = vpack.c.b16 %v272, %v271
        %v275 = vunpack.c.l.b16 %v267
        %v276 = vpack.c.b16 %v275, %v275
        %vm277 = vsmask.f32 7424
        %v279 = vshrl.u32 %v273, 16
        %v281 = vshll.u32 %v273, 16
        %v283 = vrot.slane %v281, 1
        %v284 = vor.u32 %v279, %v283
        %v286 = vshll.u32 %v276, 16
        %v288 = vrot.slane %v286, 1
        %v289 = vsel %vm277, %v284, %v288
        %290 = vrot.lane.b32.xlu0 %v289, 64
        %v291 = vpop.permute.xlu0 %290
        %v293 = vunpack.c.l.b16 %v268
        %v294 = vpack.c.b16 %v272, %v293
        %vm295 = vcmask 1046528
        %v296 = vrot.slane %v294, 1
        %v297 = vrot.slane %v276, 1
        %v298 = vsel %vm295, %v296, %v297
        %vm299 = vcmask 523264
        %v301 = vsel %vm299, %v273, %v291
        %v303 = vld [vmem:[#allocation3] sm:$0xf]
        %v304 = vld [vmem:[#allocation3 + $0x4] sm:$0xf]
        %v305 = vld [vmem:[#allocation3 + $0x8] sm:$0xf]
        %v306 = vld [vmem:[#allocation3 + $0xc] sm:$0xf]
        %v307 = vld [vmem:[#allocation3 + $0x10] sm:$0xf]
        %v308 = vld [vmem:[#allocation3 + $0x14] sm:$0xf]
        %v309 = vld [vmem:[#allocation3 + $0x18] sm:$0xf]
        %v310 = vld [vmem:[#allocation3 + $0x1c] sm:$0xf]
        %v311 = vld [vmem:[#allocation3 + $0x20] sm:$0xf]
        %v312 = vld [vmem:[#allocation3 + $0x24] sm:$0xf]
        %v313 = vld [vmem:[#allocation3 + $0x28] sm:$0xf]
        %v314 = vld [vmem:[#allocation3 + $0x2c] sm:$0xf]
        %v315 = vld [vmem:[#allocation3 + $0x30] sm:$0xf]
        %v316 = vld [vmem:[#allocation3 + $0x34] sm:$0xf]
        %v317 = vld [vmem:[#allocation3 + $0x38] sm:$0xf]
        %v318 = vld [vmem:[#allocation3 + $0x3c] sm:$0xf]
        %v319 = vld [vmem:[#allocation3 + $0x40] sm:$0xf]
        %v320 = vld [vmem:[#allocation3 + $0x44] sm:$0xf]
        %v321 = vld [vmem:[#allocation3 + $0x48] sm:$0xf]
        %v322 = vld [vmem:[#allocation3 + $0x4c] sm:$0xf]
        %v323 = vld [vmem:[#allocation3 + $0x50] sm:$0xf]
        %v324 = vld [vmem:[#allocation3 + $0x54] sm:$0xf]
        %v325 = vld [vmem:[#allocation3 + $0x58] sm:$0xf]
        %v326 = vld [vmem:[#allocation3 + $0x5c] sm:$0xf]
        %v327 = vld [vmem:[%s2] sm:$0x1]
        %v329 = vlaneseq
        %v330 = vshrl.u32 %v329, 7
        %v331 = vsub.s32 0, %v330
        %v332 = vrot.slane %v327, %v331
        %v358 = vunpack.c.l.b16 %v303
        %v359 = vunpack.c.l.b16 %v304
        %v360 = vunpack.c.l.b16 %v305
        %v361 = vunpack.c.l.b16 %v306
        %v362 = vunpack.c.l.b16 %v307
        %v363 = vunpack.c.l.b16 %v308
        %v364 = vunpack.c.l.b16 %v309
        %v365 = vunpack.c.l.b16 %v310
        %v366 = vunpack.c.l.b16 %v311
        %v367 = vunpack.c.l.b16 %v312
        %v368 = vunpack.c.l.b16 %v313
        %v369 = vunpack.c.l.b16 %v314
        %v370 = vunpack.c.l.b16 %v315
        %v371 = vunpack.c.l.b16 %v316
        %v372 = vunpack.c.l.b16 %v317
        %v373 = vunpack.c.l.b16 %v318
        %v374 = vunpack.c.l.b16 %v319
        %v375 = vunpack.c.l.b16 %v320
        %v376 = vunpack.c.l.b16 %v321
        %v377 = vunpack.c.l.b16 %v322
        %v378 = vunpack.c.l.b16 %v323
        %v379 = vunpack.c.l.b16 %v324
        %v380 = vunpack.c.l.b16 %v325
        %v381 = vunpack.c.l.b16 %v326
        %v382 = vpack.c.b16 %v359, %v358
        %v383 = vpack.c.b16 %v361, %v360
        %v384 = vpack.c.b16 %v363, %v362
        %v385 = vpack.c.b16 %v365, %v364
        %v386 = vpack.c.b16 %v367, %v366
        %v387 = vpack.c.b16 %v369, %v368
        %v388 = vpack.c.b16 %v371, %v370
        %v389 = vpack.c.b16 %v373, %v372
        %v390 = vpack.c.b16 %v375, %v374
        %v391 = vpack.c.b16 %v377, %v376
        %v392 = vpack.c.b16 %v379, %v378
        %v393 = vpack.c.b16 %v381, %v380
        %v407 = vsel %vm299, %v298, 0
        %409 = vmatprep.subr.bf16.mxu0 0
        %410 = vmatpush1.bf16.msra.mxu0 %v382
        %411 = vmatprep.subr.bf16.mxu0 0
        %412 = vmatpush1.bf16.msra.mxu0 %v383
        %413 = vmatprep.subr.bf16.mxu0 0
        %414 = vmatpush1.bf16.msra.mxu0 %v384
        %415 = vmatprep.subr.bf16.mxu0 0
        %416 = vmatpush1.bf16.msra.mxu0 %v385
        %417 = vmatprep.subr.bf16.mxu0 0
        %418 = vmatpush1.bf16.msra.mxu0 %v386
        %419 = vmatprep.subr.bf16.mxu0 0
        %420 = vmatpush1.bf16.msra.mxu0 %v387
        %421 = vmatprep.subr.bf16.mxu0 0
        %422 = vmatpush1.bf16.msra.mxu0 %v388
        %423 = vmatprep.subr.bf16.mxu0 0
        %424 = vmatpush1.bf16.msra.mxu0 %v389
        %425 = vmatprep.subr.bf16.mxu0 0
        %426 = vmatpush1.bf16.msra.mxu0 %v390
        %427 = vmatprep.subr.bf16.mxu0 0
        %428 = vmatpush1.bf16.msra.mxu0 %v391
        %429 = vmatprep.subr.bf16.mxu0 0
        %430 = vmatpush1.bf16.msra.mxu0 %v392
        %431 = vmatprep.subr.bf16.mxu0 0
        %432 = vmatpush1.bf16.msra.mxu0 %v393
        %433 = vmatprep.subr.bf16.mxu0 0
        %434 = vmatpush1.bf16.msra.mxu0 0
        %435 = vmatprep.subr.bf16.mxu0 0
        %436 = vmatpush1.bf16.msra.mxu0 0
        %437 = vmatprep.subr.bf16.mxu0 0
        %438 = vmatpush1.bf16.msra.mxu0 0
        %439 = vmatprep.subr.bf16.mxu0 0
        %440 = vmatpush1.bf16.msra.mxu0 0
        %441 = vmatprep.mubr.bf16.mxu0 %v407
        %442 = vmatmul.mubr.bf16.gmra.mrb[0].mxu0 %v301
        %v443 = vpop.f32.mrb[0].mxu0
        %v444 = vadd.f32 %v332, %v443
        %v445 = vpop.f32.mrb[0].mxu0
        %v446 = vpop.f32.mrb[0].mxu0
        %v447 = vadd.f32 %v332, %v446
        %v448 = vpop.f32.mrb[0].mxu0
        %449 = vdwg.mxu0
        %v450 = vmax.f32 %v444, 0.0
        %v451 = vmax.f32 %v447, 0.0
        %v452 = vpack.c.bf16 %v451, %v450
        %v454 = vunpack.c.l.b16 %v452
        %v455 = vunpack.c.h.b16 %v452
        %v456 = vpack.c.b16 %v454, %v454
        %v457 = vpack.c.b16 %v455, %v455
        %vm458 = vsmask.f32 4368
        %vm459 = vmor %vm255, %vm458
        %v461 = vshrl.u32 %v456, 16
        %v463 = vrot.slane %v461, 7
        %v464 = vshll.u32 %v456, 16
        %v466 = vor.u32 %v463, %v464
        %v467 = vrot.slane %v463, 4
        %v469 = vshrl.u32 %v457, 16
        %v471 = vrot.slane %v469, 7
        %v472 = vshll.u32 %v457, 16
        %v474 = vor.u32 %v471, %v472
        %v475 = vsel %vm459, %v467, %v474
        %v476 = vrot.slane %v471, 4
        %vm480 = vcmask 1043456
        %vm481 = vmand %vm480, %vm260
        %v482 = vld [vmem:[#allocation2] sm:$0xf]
        %v483 = vsel %vm481, %v466, %v482
        %484 = vst [vmem:[#allocation2] sm:$0xf] %v483
        %485 = vst [vmem:[#allocation2 + $0x4] sm:$0xf] %v475
        %v486 = vld [vmem:[#allocation2 + $0x8] sm:$0x1]
        %v487 = vsel %vm256, %v476, %v486
        %488 = vst [vmem:[#allocation2 + $0x8] sm:$0x1] %v487
        %v489 = vld [vmem:[#allocation2] sm:$0xf]
        %v490 = vld [vmem:[#allocation2 + $0x4] sm:$0xf]
        %v491 = vld [vmem:[#allocation2 + $0x8] sm:$0x1]
        %v492 = vld [vmem:[#allocation2] sm:$0xe]
        %v495 = vunpack.c.l.b16 %v489
        %v496 = vunpack.c.l.b16 %v490
        %v497 = vpack.c.b16 %v496, %v495
        %v500 = vunpack.c.l.b16 %v491
        %v501 = vpack.c.b16 %v500, %v500
        %v503 = vshrl.u32 %v497, 16
        %v505 = vshll.u32 %v497, 16
        %v507 = vrot.slane %v505, 1
        %v508 = vor.u32 %v503, %v507
        %v510 = vshll.u32 %v501, 16
        %v512 = vrot.slane %v510, 1
        %v513 = vsel %vm277, %v508, %v512
        %v516 = vunpack.c.l.b16 %v492
        %v517 = vpack.c.b16 %v496, %v516
        %v518 = vrot.slane %v517, 1
        %v519 = vrot.slane %v501, 1
        %v520 = vsel %vm295, %v518, %v519
        %v522 = vld [vmem:[#allocation6] sm:$0xf]
        %v523 = vld [vmem:[#allocation6 + $0x4] sm:$0xf]
        %v524 = vld [vmem:[#allocation6 + $0x8] sm:$0xf]
        %v525 = vld [vmem:[#allocation6 + $0xc] sm:$0xf]
        %v526 = vld [vmem:[#allocation6 + $0x10] sm:$0xf]
        %v527 = vld [vmem:[#allocation6 + $0x14] sm:$0xf]
        %v528 = vld [vmem:[#allocation6 + $0x18] sm:$0xf]
        %v529 = vld [vmem:[#allocation6 + $0x1c] sm:$0xf]
        %v530 = vld [vmem:[#allocation6 + $0x20] sm:$0xf]
        %v531 = vld [vmem:[#allocation6 + $0x24] sm:$0xf]
        %v532 = vld [vmem:[#allocation6 + $0x28] sm:$0xf]
        %v533 = vld [vmem:[#allocation6 + $0x2c] sm:$0xf]
        %v534 = vld [vmem:[#allocation6 + $0x30] sm:$0xf]
        %v535 = vld [vmem:[#allocation6 + $0x34] sm:$0xf]
        %v536 = vld [vmem:[#allocation6 + $0x38] sm:$0xf]
        %v537 = vld [vmem:[#allocation6 + $0x3c] sm:$0xf]
        %v538 = vld [vmem:[#allocation6 + $0x40] sm:$0xf]
        %v539 = vld [vmem:[#allocation6 + $0x44] sm:$0xf]
        %v540 = vld [vmem:[#allocation6 + $0x48] sm:$0xf]
        %v541 = vld [vmem:[#allocation6 + $0x4c] sm:$0xf]
        %v542 = vld [vmem:[#allocation6 + $0x50] sm:$0xf]
        %v543 = vld [vmem:[#allocation6 + $0x54] sm:$0xf]
        %v544 = vld [vmem:[#allocation6 + $0x58] sm:$0xf]
        %v545 = vld [vmem:[#allocation6 + $0x5c] sm:$0xf]
        %v546 = vld [vmem:[#allocation6 + $0x60] sm:$0xf]
        %v547 = vld [vmem:[#allocation6 + $0x64] sm:$0xf]
        %v548 = vld [vmem:[#allocation6 + $0x68] sm:$0xf]
        %v549 = vld [vmem:[#allocation6 + $0x6c] sm:$0xf]
        %v550 = vld [vmem:[#allocation6 + $0x70] sm:$0xf]
        %v551 = vld [vmem:[#allocation6 + $0x74] sm:$0xf]
        %v552 = vld [vmem:[#allocation6 + $0x78] sm:$0xf]
        %v553 = vld [vmem:[#allocation6 + $0x7c] sm:$0xf]
        %v554 = vld [vmem:[#allocation6 + $0x80] sm:$0xf]
        %v555 = vld [vmem:[#allocation6 + $0x84] sm:$0xf]
        %v556 = vld [vmem:[#allocation6 + $0x88] sm:$0xf]
        %v557 = vld [vmem:[#allocation6 + $0x8c] sm:$0xf]
        %v558 = vld [vmem:[#allocation6 + $0x90] sm:$0xf]
        %v559 = vld [vmem:[#allocation6 + $0x94] sm:$0xf]
        %v560 = vld [vmem:[#allocation6 + $0x98] sm:$0xf]
        %v561 = vld [vmem:[#allocation6 + $0x9c] sm:$0xf]
        %v562 = vld [vmem:[#allocation6 + $0xa0] sm:$0xf]
        %v563 = vld [vmem:[#allocation6 + $0xa4] sm:$0xf]
        %v564 = vld [vmem:[#allocation6 + $0xa8] sm:$0xf]
        %v565 = vld [vmem:[#allocation6 + $0xac] sm:$0xf]
        %v566 = vld [vmem:[#allocation6 + $0xb0] sm:$0xf]
        %v567 = vld [vmem:[#allocation6 + $0xb4] sm:$0xf]
        %v568 = vld [vmem:[#allocation6 + $0xb8] sm:$0xf]
        %v569 = vld [vmem:[#allocation6 + $0xbc] sm:$0xf]
        %v570 = vld [vmem:[%s4] sm:$0x1]
        %v572 = vlaneseq
        %v573 = vshrl.u32 %v572, 7
        %v574 = vsub.s32 0, %v573
        %v575 = vrot.slane %v570, %v574
        %v625 = vunpack.c.l.b16 %v522
        %v626 = vunpack.c.l.b16 %v523
        %v627 = vunpack.c.l.b16 %v524
        %v628 = vunpack.c.l.b16 %v525
        %v629 = vunpack.c.l.b16 %v526
        %v630 = vunpack.c.l.b16 %v527
        %v631 = vunpack.c.l.b16 %v528
        %v632 = vunpack.c.l.b16 %v529
        %v633 = vunpack.c.l.b16 %v530
        %v634 = vunpack.c.l.b16 %v531
        %v635 = vunpack.c.l.b16 %v532
        %v636 = vunpack.c.l.b16 %v533
        %v637 = vunpack.c.l.b16 %v534
        %v638 = vunpack.c.l.b16 %v535
        %v639 = vunpack.c.l.b16 %v536
        %v640 = vunpack.c.l.b16 %v537
        %v641 = vunpack.c.l.b16 %v538
        %v642 = vunpack.c.l.b16 %v539
        %v643 = vunpack.c.l.b16 %v540
        %v644 = vunpack.c.l.b16 %v541
        %v645 = vunpack.c.l.b16 %v542
        %v646 = vunpack.c.l.b16 %v543
        %v647 = vunpack.c.l.b16 %v544
        %v648 = vunpack.c.l.b16 %v545
        %v649 = vunpack.c.l.b16 %v546
        %v650 = vunpack.c.l.b16 %v547
        %v651 = vunpack.c.l.b16 %v548
        %v652 = vunpack.c.l.b16 %v549
        %v653 = vunpack.c.l.b16 %v550
        %v654 = vunpack.c.l.b16 %v551
        %v655 = vunpack.c.l.b16 %v552
        %v656 = vunpack.c.l.b16 %v553
        %v657 = vunpack.c.l.b16 %v554
        %v658 = vunpack.c.l.b16 %v555
        %v659 = vunpack.c.l.b16 %v556
        %v660 = vunpack.c.l.b16 %v557
        %v661 = vunpack.c.l.b16 %v558
        %v662 = vunpack.c.l.b16 %v559
        %v663 = vunpack.c.l.b16 %v560
        %v664 = vunpack.c.l.b16 %v561
        %v665 = vunpack.c.l.b16 %v562
        %v666 = vunpack.c.l.b16 %v563
        %v667 = vunpack.c.l.b16 %v564
        %v668 = vunpack.c.l.b16 %v565
        %v669 = vunpack.c.l.b16 %v566
        %v670 = vunpack.c.l.b16 %v567
        %v671 = vunpack.c.l.b16 %v568
        %v672 = vunpack.c.l.b16 %v569
        %v673 = vpack.c.b16 %v626, %v625
        %v674 = vpack.c.b16 %v628, %v627
        %v675 = vpack.c.b16 %v630, %v629
        %v676 = vpack.c.b16 %v632, %v631
        %v677 = vpack.c.b16 %v634, %v633
        %v678 = vpack.c.b16 %v636, %v635
        %v679 = vpack.c.b16 %v638, %v637
        %v680 = vpack.c.b16 %v640, %v639
        %v681 = vpack.c.b16 %v642, %v641
        %v682 = vpack.c.b16 %v644, %v643
        %v683 = vpack.c.b16 %v646, %v645
        %v684 = vpack.c.b16 %v648, %v647
        %v685 = vpack.c.b16 %v650, %v649
        %v686 = vpack.c.b16 %v652, %v651
        %v687 = vpack.c.b16 %v654, %v653
        %v688 = vpack.c.b16 %v656, %v655
        %v689 = vpack.c.b16 %v658, %v657
        %v690 = vpack.c.b16 %v660, %v659
        %v691 = vpack.c.b16 %v662, %v661
        %v692 = vpack.c.b16 %v664, %v663
        %v693 = vpack.c.b16 %v666, %v665
        %v694 = vpack.c.b16 %v668, %v667
        %v695 = vpack.c.b16 %v670, %v669
        %v696 = vpack.c.b16 %v672, %v671
        %721 = vmatprep.subr.bf16.mxu0 0
        %722 = vmatpush1.bf16.msra.mxu0 %v673
        %723 = vmatprep.subr.bf16.mxu0 0
        %724 = vmatpush1.bf16.msra.mxu0 %v674
        %725 = vmatprep.subr.bf16.mxu0 0
        %726 = vmatpush1.bf16.msra.mxu0 %v675
        %727 = vmatprep.subr.bf16.mxu0 0
        %728 = vmatpush1.bf16.msra.mxu0 %v676
        %729 = vmatprep.subr.bf16.mxu0 0
        %730 = vmatpush1.bf16.msra.mxu0 %v677
        %731 = vmatprep.subr.bf16.mxu0 0
        %732 = vmatpush1.bf16.msra.mxu0 %v678
        %733 = vmatprep.subr.bf16.mxu0 0
        %734 = vmatpush1.bf16.msra.mxu0 %v679
        %735 = vmatprep.subr.bf16.mxu0 0
        %736 = vmatpush1.bf16.msra.mxu0 %v680
        %737 = vmatprep.subr.bf16.mxu0 0
        %738 = vmatpush1.bf16.msra.mxu0 %v681
        %739 = vmatprep.subr.bf16.mxu0 0
        %740 = vmatpush1.bf16.msra.mxu0 %v682
        %741 = vmatprep.subr.bf16.mxu0 0
        %742 = vmatpush1.bf16.msra.mxu0 %v683
        %743 = vmatprep.subr.bf16.mxu0 0
        %744 = vmatpush1.bf16.msra.mxu0 %v684
        %745 = vmatprep.subr.bf16.mxu0 0
        %746 = vmatpush1.bf16.msra.mxu0 %v685
        %747 = vmatprep.subr.bf16.mxu0 0
        %748 = vmatpush1.bf16.msra.mxu0 %v686
        %749 = vmatprep.subr.bf16.mxu0 0
        %750 = vmatpush1.bf16.msra.mxu0 %v687
        %751 = vmatprep.subr.bf16.mxu0 0
        %752 = vmatpush1.bf16.msra.mxu0 %v688
        %753 = vmatprep.mubr.bf16.mxu0 %v513
        %754 = vmatmul.mubr.bf16.gmra.mrb[0].mxu0 %v497
        %v755 = vpop.f32.mrb[0].mxu0
        %v756 = vadd.f32 %v575, %v755
        %v757 = vpop.f32.mrb[0].mxu0
        %v758 = vpop.f32.mrb[0].mxu0
        %v759 = vadd.f32 %v575, %v758
        %v760 = vpop.f32.mrb[0].mxu0
        %761 = vdwg.mxu0
        %762 = vmatprep.subr.bf16.mxu0 0
        %763 = vmatpush1.bf16.msra.mxu0 %v689
        %764 = vmatprep.subr.bf16.mxu0 0
        %765 = vmatpush1.bf16.msra.mxu0 %v690
        %766 = vmatprep.subr.bf16.mxu0 0
        %767 = vmatpush1.bf16.msra.mxu0 %v691
        %768 = vmatprep.subr.bf16.mxu0 0
        %769 = vmatpush1.bf16.msra.mxu0 %v692
        %770 = vmatprep.subr.bf16.mxu0 0
        %771 = vmatpush1.bf16.msra.mxu0 %v693
        %772 = vmatprep.subr.bf16.mxu0 0
        %773 = vmatpush1.bf16.msra.mxu0 %v694
        %774 = vmatprep.subr.bf16.mxu0 0
        %775 = vmatpush1.bf16.msra.mxu0 %v695
        %776 = vmatprep.subr.bf16.mxu0 0
        %777 = vmatpush1.bf16.msra.mxu0 %v696
        %778 = vmatprep.subr.bf16.mxu0 0
        %779 = vmatpush1.bf16.msra.mxu0 0
        %780 = vmatprep.subr.bf16.mxu0 0
        %781 = vmatpush1.bf16.msra.mxu0 0
        %782 = vmatprep.subr.bf16.mxu0 0
        %783 = vmatpush1.bf16.msra.mxu0 0
        %784 = vmatprep.subr.bf16.mxu0 0
        %785 = vmatpush1.bf16.msra.mxu0 0
        %786 = vmatprep.subr.bf16.mxu0 0
        %787 = vmatpush1.bf16.msra.mxu0 0
        %788 = vmatprep.subr.bf16.mxu0 0
        %789 = vmatpush1.bf16.msra.mxu0 0
        %790 = vmatprep.subr.bf16.mxu0 0
        %791 = vmatpush1.bf16.msra.mxu0 0
        %792 = vmatprep.subr.bf16.mxu0 0
        %793 = vmatpush1.bf16.msra.mxu0 0
        %794 = vmatprep.mubr.bf16.mxu0 0
        %795 = vmatmul.mubr.bf16.gmra.mrb[0].mxu0 %v520
        %v796 = vpop.f32.mrb[0].mxu0
        %v797 = vadd.f32 %v756, %v796
        %v798 = vpop.f32.mrb[0].mxu0
        %v799 = vpop.f32.mrb[0].mxu0
        %v800 = vadd.f32 %v759, %v799
        %v801 = vpop.f32.mrb[0].mxu0
        %802 = vdwg.mxu0
        %v803 = vmax.f32 %v797, 0.0
        %v804 = vmax.f32 %v800, 0.0
        %807 = vrot.lane.b32.xlu0 %v803, 64
        %v808 = vpop.permute.xlu0 %807
        %809 = vrot.lane.b32.xlu0 %v804, 64
        %v810 = vpop.permute.xlu0 %809
        %v813 = vmax.f32 %v803, %v808
        %v814 = vmax.f32 %v804, %v810
        %v817 = vcombine.high %v813, %v813
        %v819 = vunpack.c.l.s4 1983009808
        %v820 = vunpack.c.0.s8 %v819
        %v821 = vlaneseq
        %v822 = vshrl.u32 %v821, 7
        %v823 = vsub.s32 %v820, %v822
        %v824 = vrot.slane %v813, %v823
        %v826 = vunpack.c.l.s4 1983009808
        %v827 = vunpack.c.0.s8 %v826
        %v828 = vlaneseq
        %v829 = vshrl.u32 %v828, 7
        %v830 = vsub.s32 %v827, %v829
        %v831 = vrot.slane %v817, %v830
        %v832 = vcombine.high %v824, %v824
        %v833 = vcombine.high %v831, %v831
        %v834 = vcombine.high %v814, %v814
        %v836 = vunpack.c.l.s4 1983009808
        %v837 = vunpack.c.0.s8 %v836
        %v838 = vlaneseq
        %v839 = vshrl.u32 %v838, 7
        %v840 = vsub.s32 %v837, %v839
        %v841 = vrot.slane %v814, %v840
        %v843 = vunpack.c.l.s4 1983009808
        %v844 = vunpack.c.0.s8 %v843
        %v845 = vlaneseq
        %v846 = vshrl.u32 %v845, 7
        %v847 = vsub.s32 %v844, %v846
        %v848 = vrot.slane %v834, %v847
        %v849 = vcombine.high %v841, %v841
        %v850 = vcombine.high %v848, %v848
        %vm859 = vcmask 517120
        %v860 = vsel %vm859, %v824, -inf
        %v861 = vrot.slane %v860, 4
        %v862 = vmax.f32 %v860, %v861
        %v863 = vrot.slane %v862, 2
        %v864 = vmax.f32 %v862, %v863
        %v865 = vrot.slane %v864, 1
        %v866 = vmax.f32 %v864, %v865
        %v867 = vsel %vm859, %v832, -inf
        %v868 = vrot.slane %v867, 4
        %v869 = vmax.f32 %v867, %v868
        %v870 = vrot.slane %v869, 2
        %v871 = vmax.f32 %v869, %v870
        %v872 = vrot.slane %v871, 1
        %v873 = vmax.f32 %v871, %v872
        %v874 = vsel %vm859, %v831, -inf
        %v875 = vrot.slane %v874, 4
        %v876 = vmax.f32 %v874, %v875
        %v877 = vrot.slane %v876, 2
        %v878 = vmax.f32 %v876, %v877
        %v879 = vrot.slane %v878, 1
        %v880 = vmax.f32 %v878, %v879
        %v881 = vsel %vm859, %v833, -inf
        %v882 = vrot.slane %v881, 4
        %v883 = vmax.f32 %v881, %v882
        %v884 = vrot.slane %v883, 2
        %v885 = vmax.f32 %v883, %v884
        %v886 = vrot.slane %v885, 1
        %v887 = vmax.f32 %v885, %v886
        %v888 = vsel %vm859, %v841, -inf
        %v889 = vrot.slane %v888, 4
        %v890 = vmax.f32 %v888, %v889
        %v891 = vrot.slane %v890, 2
        %v892 = vmax.f32 %v890, %v891
        %v893 = vrot.slane %v892, 1
        %v894 = vmax.f32 %v892, %v893
        %v895 = vsel %vm859, %v849, -inf
        %v896 = vrot.slane %v895, 4
        %v897 = vmax.f32 %v895, %v896
        %v898 = vrot.slane %v897, 2
        %v899 = vmax.f32 %v897, %v898
        %v900 = vrot.slane %v899, 1
        %v901 = vmax.f32 %v899, %v900
        %v902 = vsel %vm859, %v848, -inf
        %v903 = vrot.slane %v902, 4
        %v904 = vmax.f32 %v902, %v903
        %v905 = vrot.slane %v904, 2
        %v906 = vmax.f32 %v904, %v905
        %v907 = vrot.slane %v906, 1
        %v908 = vmax.f32 %v906, %v907
        %v909 = vsel %vm859, %v850, -inf
        %v910 = vrot.slane %v909, 4
        %v911 = vmax.f32 %v909, %v910
        %v912 = vrot.slane %v911, 2
        %v913 = vmax.f32 %v911, %v912
        %v914 = vrot.slane %v913, 1
        %v915 = vmax.f32 %v913, %v914
        %vm920 = vcmask 1041409
        %v921 = vsel %vm920, %v873, %v866
        %vm922 = vcmask 1042434
        %v923 = vsel %vm922, %v880, %v921
        %vm924 = vcmask 1043459
        %v925 = vsel %vm924, %v887, %v923
        %v931 = vsel %vm920, %v901, %v894
        %v932 = vsel %vm922, %v908, %v931
        %v933 = vsel %vm924, %v915, %v932
        %934 = vrot.lane.b32.xlu0 %v933, 64
        %v935 = vpop.permute.xlu0 %934
        %v937 = vsel %vm299, %v925, %v935
        %938 = vst [vmem:[%s247] sm:$0xf] %v937
        %s939 = sand.u32 %s139, 1
        %s940 = scalar_lea.sflag [#allocation5], %s939
        %s941 = sand.u32 %s139, 1
        %s942 = smul.addr %s941, 4
        %s943 = scalar_lea.vmem [#allocation8], %s942
        // Predicated region
        $region49: #{tpu_custom_call.1} parent=39 // pred_check
          %p944 = pneg %p149
        $region50: #{tpu_custom_call.1} parent=39 // pred_check_branch
          %946 = sbr.rel (%p944) target = $region52
        $region51: #{tpu_custom_call.1} parent=39 // pred_region
          %s948 = ssub.s32 64, 64
          %949 = vsyncadd %s940, %s948
          %s950 = smul.addr %s21, 64
          %s951 = scalar_lea.hbm %s5, %s950
          %s953 = sshll.u32 %s943, 4
          %s954 = int_to_ptr.vmem [resolvable:$true] %s953
          %956 = dma.vmem_to_hbm [thread:$0]  %s954, 64, %s951, %s940
        $region52: #{tpu_custom_call.1} parent=39 // pred_fallthru
          _
      $region40: #{tpu_custom_call.1} parent=5 // pred_fallthru
        _
      %p957 = scmp.le.s32.totalorder 2, %s16
      // Predicated region
      $region53: #{tpu_custom_call.1} parent=5 // pred_check
        %p958 = pneg %p957
      $region54: #{tpu_custom_call.1} parent=5 // pred_check_branch
        %960 = sbr.rel (%p958) target = $region56
      $region55: #{tpu_custom_call.1} parent=5 // pred_region
        %s961 = ssub.s32 %s16, 2
        // Predicated region
        $region57: #{tpu_custom_call.1} parent=55 // pred_check
          %p962 = pneg %p155
        $region58: #{tpu_custom_call.1} parent=55 // pred_check_branch
          %964 = sbr.rel (%p962) target = $region60
        $region59: #{tpu_custom_call.1} parent=55 // pred_region
          %s965 = sand.u32 %s140, 1
          %s966 = scalar_lea.sflag [#allocation5], %s965
          %s967 = sand.u32 %s140, 1
          %s968 = smul.addr %s967, 4
          %s969 = scalar_lea.vmem [#allocation8], %s968
          %970 = dma.done %s966, 64
        $region60: #{tpu_custom_call.1} parent=55 // pred_fallthru
          _
      $region56: #{tpu_custom_call.1} parent=5 // pred_fallthru
        _
    $region6: #{tpu_custom_call.1} parent=1 // loop_footer
      %s20 = sadd.s32 1, %s16
    $region7: #{tpu_custom_call.1} parent=1 // loop_footer_branch
      %15 = sbr.rel target = $region3
    $region8: #{tpu_custom_call.1} parent=1 // loop_exit
      _
    %971 = vsyncpa [#allocation4], 1
    %s972 = scalar_lea.sflag [#allocation4], 1
    %973 = vsyncpa %s972, 1
    %974 = vsyncpa [#allocation7], 1
    %975 = vsyncpa [#allocation5], 1
    %s976 = scalar_lea.sflag [#allocation5], 1
    %977 = vsyncpa %s976, 1

</llo_original>
